<compile_context>
chip_gen: v6e
topology: v6e:2x2x1
jax: 0.10.0
libtpu: 0.0.40
codegen_flags: <defaults>
</compile_context>

<pallas_src>
import functools
import math

import numpy as np
import jax
import jax.numpy as jnp
from jax import lax
from jax.experimental import pallas as pl
from jax.experimental.pallas import tpu as pltpu


def _round_up(x, m):
    return ((x + m - 1) // m) * m


# --------------------------------- kernels ----------------------------------

def _gru_dh(h, wrz, whh, H):
    """Core cell math in f32, MXU operands in the weights' stored dtype."""
    mm = wrz.dtype
    rz = jax.nn.sigmoid(
        jnp.dot(h.astype(mm), wrz, preferred_element_type=jnp.float32))
    r = rz[:, :H]
    z = rz[:, H:]
    u = jnp.tanh(
        jnp.dot((r * h).astype(mm), whh, preferred_element_type=jnp.float32))
    return (1.0 - z) * (u - h)


def _cell_kernel(h_ref, wrz_ref, whh_ref, dh_ref, *, H):
    """One forward() of the module: dh = (1-z)*(u-h)."""
    h = h_ref[...].astype(jnp.float32)
    dh = _gru_dh(h, wrz_ref[...], whh_ref[...], H)
    dh_ref[...] = dh.astype(dh_ref.dtype)


def _euler_kernel(h0_ref, wrz_ref, whh_ref, hout_ref, *, H, dt, n_steps):
    """Fused Euler integration: h <- h + dt * forward(t, h), n_steps times.

    grid = (batch_tiles,); the whole time loop runs in-kernel (lax.fori_loop),
    h is carried as an f32 value, weights are loaded once per batch tile
    (constant index_map keeps them VMEM-resident), output written once.
    """
    wrz = wrz_ref[...]
    whh = whh_ref[...]
    h0 = h0_ref[...].astype(jnp.float32)

    def step(_, h):
        return h + dt * _gru_dh(h, wrz, whh, H)

    h_T = lax.fori_loop(0, n_steps, step, h0)
    hout_ref[...] = h_T.astype(hout_ref.dtype)


# -------------------------------- wrappers -----------------------------------

def _batch_tiling(B, block_rows, dtype):
    """Pad batch to sublane packing; guarantee >=2 tiles when possible (v7x)."""
    sub = 16 if dtype == jnp.bfloat16 else 8
    Bp = _round_up(B, sub)
    TB = min(block_rows, Bp)
    if Bp >= 2 * sub:
        # At least two blocks on the 'parallel' axis so both v7x TCs get work.
        TB = min(TB, _round_up(Bp // 2, sub))
    Bp = _round_up(Bp, TB)
    return Bp, TB


def _prep(h, w_rz, w_hh, block_rows, use_bf16):
    B, H = h.shape
    Bp, TB = _batch_tiling(B, block_rows, h.dtype)
    h_in = jnp.pad(h, ((0, Bp - B), (0, 0))) if Bp != B else h
    mm = jnp.bfloat16 if use_bf16 else jnp.float32
    # Hoisted cast: weights go to HBM already in the matmul dtype.
    return h_in, w_rz.astype(mm), w_hh.astype(mm), B, H, Bp, TB


def gru_ode_cell_forward(t, h, w_rz, w_hh, *, block_rows=256, use_bf16=False):
    """dh = FullGRUODECell_Autonomous.forward(t, h); `t` unused (autonomous)."""
    del t
    h_in, wrz, whh, B, H, Bp, TB = _prep(h, w_rz, w_hh, block_rows, use_bf16)
    out = pl.pallas_call(
        functools.partial(_cell_kernel, H=H),
        out_shape=jax.ShapeDtypeStruct((Bp, H), h.dtype),
        grid_spec=pltpu.PrefetchScalarGridSpec(
            num_scalar_prefetch=0,
            grid=(Bp // TB,),
            in_specs=[pl.BlockSpec((TB, H), lambda i: (i, 0)),
                      pl.BlockSpec((H, 2 * H), lambda i: (0, 0)),
                      pl.BlockSpec((H, H), lambda i: (0, 0))],
            out_specs=pl.BlockSpec((TB, H), lambda i: (i, 0))),
        compiler_params=pltpu.CompilerParams(
            dimension_semantics=("parallel",)),
    )(h_in, wrz, whh)
    return out[:B]


def gru_ode_euler(h0, w_rz, w_hh, *, dt, n_steps, block_rows=256,
                  use_bf16=False):
    """h_T after n_steps of h <- h + dt * forward(t, h), fully fused on-chip."""
    h_in, wrz, whh, B, H, Bp, TB = _prep(h0, w_rz, w_hh, block_rows, use_bf16)
    out = pl.pallas_call(
        functools.partial(_euler_kernel, H=H, dt=float(dt),
                          n_steps=int(n_steps)),
        out_shape=jax.ShapeDtypeStruct((Bp, H), h0.dtype),
        grid_spec=pltpu.PrefetchScalarGridSpec(
            num_scalar_prefetch=0,
            grid=(Bp // TB,),
            in_specs=[pl.BlockSpec((TB, H), lambda i: (i, 0)),
                      pl.BlockSpec((H, 2 * H), lambda i: (0, 0)),
                      pl.BlockSpec((H, H), lambda i: (0, 0))],
            out_specs=pl.BlockSpec((TB, H), lambda i: (i, 0))),
        compiler_params=pltpu.CompilerParams(
            dimension_semantics=("parallel",)),
    )(h_in, wrz, whh)
    return out[:B]


# ------------------------- params & pure-JAX reference ------------------------

def init_params(key, H):
    """torch.nn.Linear default init (uniform +-1/sqrt(fan_in)), stored [in,out]."""
    k_hr, k_hz, k_hh = jax.random.split(key, 3)
    bound = 1.0 / math.sqrt(H)

    def w(k):
        return jax.random.uniform(k, (H, H), jnp.float32, -bound, bound)

    W_hr, W_hz, W_hh = w(k_hr), w(k_hz), w(k_hh)
    w_rz = jnp.concatenate([W_hr, W_hz], axis=1)   # [H, 2H]  (r half, z half)
    return w_rz, W_hh


def ref_dh(h, w_rz, w_hh, H):
    hp = jnp.dot(h, w_rz, precision=jax.lax.Precision.HIGHEST)
    rz = jax.nn.sigmoid(hp)
    r, z = rz[:, :H], rz[:, H:]
    u = jnp.tanh(jnp.dot(r * h, w_hh, precision=jax.lax.Precision.HIGHEST))
    return (1.0 - z) * (u - h)


def ref_euler(h, w_rz, w_hh, H, dt, n_steps):
    for _ in range(n_steps):
        h = h + dt * ref_dh(h, w_rz, w_hh, H)
    return h


# ----------------------------------- main -------------------------------------

if __name__ == "__main__":
    B, H = 8, 128                      # lane-dense hidden size (multiple of 128)
    key = jax.random.PRNGKey(0)
    k_w, k_h = jax.random.split(key)
    w_rz, w_hh = init_params(k_w, H)
    h = jax.random.normal(k_h, (B, H), jnp.float32)

    # 1) single module forward: dh = forward(t, h)
    dh = gru_ode_cell_forward(0.0, h, w_rz, w_hh)
    jax.block_until_ready(dh)
    dh_ref = ref_dh(h, w_rz, w_hh, H)
    np.testing.assert_allclose(np.asarray(dh), np.asarray(dh_ref),
                               rtol=2e-2, atol=2e-2)

    # 2) fused Euler integration (how the cell is used by the ODE solver) —
    #    the whole time loop runs inside one kernel invocation per batch tile.
    dt, n_steps = 0.05, 32
    h_T = gru_ode_euler(h, w_rz, w_hh, dt=dt, n_steps=n_steps)
    jax.block_until_ready(h_T)
    h_T_ref = ref_euler(h, w_rz, w_hh, H, dt, n_steps)
    np.testing.assert_allclose(np.asarray(h_T), np.asarray(h_T_ref),
                               rtol=5e-2, atol=5e-2)

    # 3) bf16 MXU path (v5e/v6e/v7x): weights pre-cast to bf16 in the wrapper,
    #    f32 accumulation, elementwise math & transcendentals stay f32.
    dh_bf16 = gru_ode_cell_forward(0.0, h, w_rz, w_hh, use_bf16=True)
    jax.block_until_ready(dh_bf16)
    np.testing.assert_allclose(np.asarray(dh_bf16), np.asarray(dh_ref),
                               rtol=1e-1, atol=5e-2)

    h_T_bf16 = gru_ode_euler(h, w_rz, w_hh, dt=dt, n_steps=n_steps,
                             use_bf16=True)
    jax.block_until_ready(h_T_bf16)
    np.testing.assert_allclose(np.asarray(h_T_bf16), np.asarray(h_T_ref),
                               rtol=1e-1, atol=1e-1)

    assert dh.shape == (B, H) and h_T.shape == (B, H)
    assert np.all(np.isfinite(np.asarray(dh)))
    assert np.all(np.isfinite(np.asarray(h_T)))
    print("KERNEL_OK")
</pallas_src>

<mosaic_0001>
module attributes {stable_mosaic.version = 11 : i64} {
  func.func @_cell_kernel(%arg0: i32, %arg1: memref<8x128xf32, #tpu.memory_space<vmem>>, %arg2: memref<128x256xf32, #tpu.memory_space<vmem>>, %arg3: memref<128x128xf32, #tpu.memory_space<vmem>>, %arg4: memref<8x128xf32, #tpu.memory_space<vmem>>) attributes {dimension_semantics = [#tpu.dimension_semantics<parallel>], iteration_bounds = array<i64: 1>, scalar_prefetch = 0 : i64, scratch_operands = 0 : i64, tpu.core_type = #tpu.core_type<tc>, window_params = [{transform_indices = @transform_0, window_bounds = array<i64: 8, 128>}, {pipeline_mode = #tpu.pipeline_mode<synchronous>, transform_indices = @transform_1, window_bounds = array<i64: 128, 256>}, {pipeline_mode = #tpu.pipeline_mode<synchronous>, transform_indices = @transform_2, window_bounds = array<i64: 128, 128>}, {transform_indices = @transform_3, window_bounds = array<i64: 8, 128>}]} {
    %c0 = arith.constant 0 : index
    %c0_0 = arith.constant 0 : index
    %0 = vector.load %arg1[%c0, %c0_0] : memref<8x128xf32, #tpu.memory_space<vmem>>, vector<8x128xf32>
    %c0_1 = arith.constant 0 : index
    %c0_2 = arith.constant 0 : index
    %1 = vector.load %arg2[%c0_1, %c0_2] : memref<128x256xf32, #tpu.memory_space<vmem>>, vector<128x256xf32>
    %c0_3 = arith.constant 0 : index
    %c0_4 = arith.constant 0 : index
    %2 = vector.load %arg3[%c0_3, %c0_4] : memref<128x128xf32, #tpu.memory_space<vmem>>, vector<128x128xf32>
    %cst = arith.constant dense<0.000000e+00> : vector<8x256xf32>
    %3 = tpu.matmul %0, %1, %cst {dimension_numbers = #tpu.dot_dimension_numbers<[1], [0], [0], [1], [0, 0, 1, 1], [], []>} : vector<8x128xf32>, vector<128x256xf32>, vector<8x256xf32> -> vector<8x256xf32>
    %4 = arith.negf %3 : vector<8x256xf32>
    %5 = math.exp %4 : vector<8x256xf32>
    %cst_5 = arith.constant 1.000000e+00 : f32
    %6 = vector.broadcast %cst_5 : f32 to vector<8x256xf32>
    %7 = arith.addf %6, %5 : vector<8x256xf32>
    %8 = arith.divf %6, %7 : vector<8x256xf32>
    %9 = vector.extract_strided_slice %8 {offsets = [0, 0], sizes = [8, 128], strides = [1, 1]} : vector<8x256xf32> to vector<8x128xf32>
    %10 = vector.extract_strided_slice %8 {offsets = [0, 128], sizes = [8, 128], strides = [1, 1]} : vector<8x256xf32> to vector<8x128xf32>
    %11 = arith.mulf %9, %0 : vector<8x128xf32>
    %cst_6 = arith.constant dense<0.000000e+00> : vector<8x128xf32>
    %12 = tpu.matmul %11, %2, %cst_6 {dimension_numbers = #tpu.dot_dimension_numbers<[1], [0], [0], [1], [0, 0, 1, 1], [], []>} : vector<8x128xf32>, vector<128x128xf32>, vector<8x128xf32> -> vector<8x128xf32>
    %13 = math.tanh %12 : vector<8x128xf32>
    %cst_7 = arith.constant 1.000000e+00 : f32
    %14 = vector.broadcast %cst_7 : f32 to vector<8x128xf32>
    %15 = arith.subf %14, %10 : vector<8x128xf32>
    %16 = arith.subf %13, %0 : vector<8x128xf32>
    %17 = arith.mulf %15, %16 : vector<8x128xf32>
    %c0_8 = arith.constant 0 : index
    %c0_9 = arith.constant 0 : index
    %18 = vector.load %arg4[%c0_8, %c0_9] : memref<8x128xf32, #tpu.memory_space<vmem>>, vector<8x128xf32>
    tpu.vector_store %arg4[%c0_8, %c0_9], %17 {strides = array<i32>} : memref<8x128xf32, #tpu.memory_space<vmem>>, vector<8x128xf32>,
    return
  }
  func.func @transform_0(%arg0: i32) -> (i32, i32) {
    %c0_i32 = arith.constant 0 : i32
    %c0_i32_0 = arith.constant 0 : i32
    return %arg0, %c0_i32 : i32, i32
  }
  func.func @transform_1(%arg0: i32) -> (i32, i32) {
    %c0_i32 = arith.constant 0 : i32
    %c0_i32_0 = arith.constant 0 : i32
    %c0_i32_1 = arith.constant 0 : i32
    return %c0_i32, %c0_i32_0 : i32, i32
  }
  func.func @transform_2(%arg0: i32) -> (i32, i32) {
    %c0_i32 = arith.constant 0 : i32
    %c0_i32_0 = arith.constant 0 : i32
    %c0_i32_1 = arith.constant 0 : i32
    return %c0_i32, %c0_i32_0 : i32, i32
  }
  func.func @transform_3(%arg0: i32) -> (i32, i32) {
    %c0_i32 = arith.constant 0 : i32
    %c0_i32_0 = arith.constant 0 : i32
    return %arg0, %c0_i32 : i32, i32
  }
}

</mosaic_0001>

<llo_original>
// kernel: tpu_custom_call.1
$region0: #{tpu_custom_call.1}
  #allocation0 [shape = 'u32[]', space=smem, size = 0x4, offset = 0x4, fixed_abs, tag = 'smem constant byte address 0x4 - core index']
  #allocation1 [shape = 'u32[144,128]{1,0:T(1,128)}', space=vmem, size = 0x12000, scoped, tag = 'internal scratch']
  %s0 = inlined_call_operand.hbm [shape: f32[8,128], index: 0, kind: input, shape index: {}]
  %s1 = inlined_call_operand.hbm [shape: f32[128,256], index: 1, kind: input, shape index: {}]
  %s2 = inlined_call_operand.hbm [shape: f32[128,128], index: 2, kind: input, shape index: {}]
  %s3 = inlined_call_operand.hbm [shape: f32[8,128], index: 3, kind: output, shape index: {}]
  %s4 = sld [smem:[#allocation0]]
  $region34: #{tpu_custom_call.1} parent=0
    _
  %s6 = ssub.s32 1, %s4
  %s7 = scalar_select 0, %s6, %s4
  $region1: #{tpu_custom_call.1} parent=0
    #allocation2 [shape = 'u8[4096]{0}', space=vmem, size = 0x1000, scoped, tag = 'input window, operand 0, single buffered']
    #allocation3 [shape = 's32[1]{0}', space=sflag, size = 0x4, scoped, tag = 'scoped memory for tpu_custom_call.1']
    #allocation4 [shape = 's32[1]{0}', space=sflag, size = 0x4, scoped, tag = 'scoped memory for tpu_custom_call.1']
    #allocation5 [shape = 'u8[131072]{0}', space=vmem, size = 0x20000, scoped, tag = 'input window, operand 1, single buffered']
    #allocation6 [shape = 's32[1]{0}', space=sflag, size = 0x4, scoped, tag = 'scoped memory for tpu_custom_call.1']
    #allocation7 [shape = 'u8[65536]{0}', space=vmem, size = 0x10000, scoped, tag = 'input window, operand 2, single buffered']
    #allocation8 [shape = 'u8[4096]{0}', space=vmem, size = 0x1000, scoped, tag = 'output window, operand 0, single buffered']
    %8 = vsyncpa [#allocation3], 0
    %9 = vsyncpa [#allocation6], 0
    %10 = vsyncpa [#allocation4], 0
    // Predicated region
    $region2: #{tpu_custom_call.1} parent=1 // pred_check
      _
    $region3: #{tpu_custom_call.1} parent=1 // pred_check_branch
      %12 = sbr.rel (0) target = $region5
    $region4: #{tpu_custom_call.1} parent=1 // pred_region
      %s14 = ssub.s32 128, 128
      %15 = vsyncadd [#allocation3], %s14
      %s17 = sshll.u32 [#allocation2], 4
      %s18 = int_to_ptr.vmem [resolvable:$true] %s17
      %20 = dma.hbm_to_vmem [thread:$0]  %s0, 128, %s18, [#allocation3]
    $region5: #{tpu_custom_call.1} parent=1 // pred_fallthru
      _
    // Predicated region
    $region6: #{tpu_custom_call.1} parent=1 // pred_check
      _
    $region7: #{tpu_custom_call.1} parent=1 // pred_check_branch
      %22 = sbr.rel (0) target = $region9
    $region8: #{tpu_custom_call.1} parent=1 // pred_region
      %s24 = ssub.s32 4096, 4096
      %25 = vsyncadd [#allocation6], %s24
      %s26 = sshll.u32 [#allocation5], 4
      %s27 = int_to_ptr.vmem [resolvable:$true] %s26
      %32 = dma.hbm_to_vmem [thread:$0]  %s1, 4096, %s27, [#allocation6], 256, 256, 16
    $region9: #{tpu_custom_call.1} parent=1 // pred_fallthru
      _
    // Predicated region
    $region10: #{tpu_custom_call.1} parent=1 // pred_check
      _
    $region11: #{tpu_custom_call.1} parent=1 // pred_check_branch
      %34 = sbr.rel (0) target = $region13
    $region12: #{tpu_custom_call.1} parent=1 // pred_region
      %s36 = ssub.s32 2048, 2048
      %37 = vsyncadd [#allocation6], %s36
      %s38 = sshll.u32 [#allocation7], 4
      %s39 = int_to_ptr.vmem [resolvable:$true] %s38
      %44 = dma.hbm_to_vmem [thread:$0]  %s2, 2048, %s39, [#allocation6], 128, 128, 8
    $region13: #{tpu_custom_call.1} parent=1 // pred_fallthru
      _
    // Predicated region
    $region14: #{tpu_custom_call.1} parent=1 // pred_check
      _
    $region15: #{tpu_custom_call.1} parent=1 // pred_check_branch
      %46 = sbr.rel (0) target = $region17
    $region16: #{tpu_custom_call.1} parent=1 // pred_region
      %47 = dma.done [#allocation3], 128
    $region17: #{tpu_custom_call.1} parent=1 // pred_fallthru
      _
    // Predicated region
    $region18: #{tpu_custom_call.1} parent=1 // pred_check
      _
    $region19: #{tpu_custom_call.1} parent=1 // pred_check_branch
      %49 = sbr.rel (0) target = $region21
    $region20: #{tpu_custom_call.1} parent=1 // pred_region
      %50 = dma.done [#allocation6], 4096
    $region21: #{tpu_custom_call.1} parent=1 // pred_fallthru
      _
    // Predicated region
    $region22: #{tpu_custom_call.1} parent=1 // pred_check
      _
    $region23: #{tpu_custom_call.1} parent=1 // pred_check_branch
      %52 = sbr.rel (0) target = $region25
    $region24: #{tpu_custom_call.1} parent=1 // pred_region
      %53 = dma.done [#allocation6], 2048
    $region25: #{tpu_custom_call.1} parent=1 // pred_fallthru
      _
    %v54 = vld [vmem:[#allocation2] sm:$0xff]
    %v55 = vld [vmem:[#allocation5] sm:$0xff]
    %v56 = vld [vmem:[#allocation5 + $0x8] sm:$0xff]
    %v57 = vld [vmem:[#allocation5 + $0x10] sm:$0xff]
    %v58 = vld [vmem:[#allocation5 + $0x18] sm:$0xff]
    %v59 = vld [vmem:[#allocation5 + $0x20] sm:$0xff]
    %v60 = vld [vmem:[#allocation5 + $0x28] sm:$0xff]
    %v61 = vld [vmem:[#allocation5 + $0x30] sm:$0xff]
    %v62 = vld [vmem:[#allocation5 + $0x38] sm:$0xff]
    %v63 = vld [vmem:[#allocation5 + $0x40] sm:$0xff]
    %v64 = vld [vmem:[#allocation5 + $0x48] sm:$0xff]
    %v65 = vld [vmem:[#allocation5 + $0x50] sm:$0xff]
    %v66 = vld [vmem:[#allocation5 + $0x58] sm:$0xff]
    %v67 = vld [vmem:[#allocation5 + $0x60] sm:$0xff]
    %v68 = vld [vmem:[#allocation5 + $0x68] sm:$0xff]
    %v69 = vld [vmem:[#allocation5 + $0x70] sm:$0xff]
    %v70 = vld [vmem:[#allocation5 + $0x78] sm:$0xff]
    %v71 = vld [vmem:[#allocation5 + $0x80] sm:$0xff]
    %v72 = vld [vmem:[#allocation5 + $0x88] sm:$0xff]
    %v73 = vld [vmem:[#allocation5 + $0x90] sm:$0xff]
    %v74 = vld [vmem:[#allocation5 + $0x98] sm:$0xff]
    %v75 = vld [vmem:[#allocation5 + $0xa0] sm:$0xff]
    %v76 = vld [vmem:[#allocation5 + $0xa8] sm:$0xff]
    %v77 = vld [vmem:[#allocation5 + $0xb0] sm:$0xff]
    %v78 = vld [vmem:[#allocation5 + $0xb8] sm:$0xff]
    %v79 = vld [vmem:[#allocation5 + $0xc0] sm:$0xff]
    %v80 = vld [vmem:[#allocation5 + $0xc8] sm:$0xff]
    %v81 = vld [vmem:[#allocation5 + $0xd0] sm:$0xff]
    %v82 = vld [vmem:[#allocation5 + $0xd8] sm:$0xff]
    %v83 = vld [vmem:[#allocation5 + $0xe0] sm:$0xff]
    %v84 = vld [vmem:[#allocation5 + $0xe8] sm:$0xff]
    %v85 = vld [vmem:[#allocation5 + $0xf0] sm:$0xff]
    %v86 = vld [vmem:[#allocation5 + $0xf8] sm:$0xff]
    %v87 = vld [vmem:[#allocation7] sm:$0xff]
    %v88 = vld [vmem:[#allocation7 + $0x8] sm:$0xff]
    %v89 = vld [vmem:[#allocation7 + $0x10] sm:$0xff]
    %v90 = vld [vmem:[#allocation7 + $0x18] sm:$0xff]
    %v91 = vld [vmem:[#allocation7 + $0x20] sm:$0xff]
    %v92 = vld [vmem:[#allocation7 + $0x28] sm:$0xff]
    %v93 = vld [vmem:[#allocation7 + $0x30] sm:$0xff]
    %v94 = vld [vmem:[#allocation7 + $0x38] sm:$0xff]
    %v95 = vld [vmem:[#allocation7 + $0x40] sm:$0xff]
    %v96 = vld [vmem:[#allocation7 + $0x48] sm:$0xff]
    %v97 = vld [vmem:[#allocation7 + $0x50] sm:$0xff]
    %v98 = vld [vmem:[#allocation7 + $0x58] sm:$0xff]
    %v99 = vld [vmem:[#allocation7 + $0x60] sm:$0xff]
    %v100 = vld [vmem:[#allocation7 + $0x68] sm:$0xff]
    %v101 = vld [vmem:[#allocation7 + $0x70] sm:$0xff]
    %v102 = vld [vmem:[#allocation7 + $0x78] sm:$0xff]
    %103 = vmatprep.subr.mxu0 %v86
    %104 = vmatpush1.msra.mxu0 %v85
    %105 = vmatprep.subr.mxu0 %v84
    %106 = vmatpush1.msra.mxu0 %v83
    %107 = vmatprep.subr.mxu0 %v82
    %108 = vmatpush1.msra.mxu0 %v81
    %109 = vmatprep.subr.mxu0 %v80
    %110 = vmatpush1.msra.mxu0 %v79
    %111 = vmatprep.subr.mxu0 %v78
    %112 = vmatpush1.msra.mxu0 %v77
    %113 = vmatprep.subr.mxu0 %v76
    %114 = vmatpush1.msra.mxu0 %v75
    %115 = vmatprep.subr.mxu0 %v74
    %116 = vmatpush1.msra.mxu0 %v73
    %117 = vmatprep.subr.mxu0 %v72
    %118 = vmatpush1.msra.mxu0 %v71
    %119 = vmatprep.subr.mxu0 %v70
    %120 = vmatpush1.msra.mxu0 %v69
    %121 = vmatprep.subr.mxu0 %v68
    %122 = vmatpush1.msra.mxu0 %v67
    %123 = vmatprep.subr.mxu0 %v66
    %124 = vmatpush1.msra.mxu0 %v65
    %125 = vmatprep.subr.mxu0 %v64
    %126 = vmatpush1.msra.mxu0 %v63
    %127 = vmatprep.subr.mxu0 %v62
    %128 = vmatpush1.msra.mxu0 %v61
    %129 = vmatprep.subr.mxu0 %v60
    %130 = vmatpush1.msra.mxu0 %v59
    %131 = vmatprep.subr.mxu0 %v58
    %132 = vmatpush1.msra.mxu0 %v57
    %133 = vmatprep.subr.mxu0 %v56
    %134 = vmatpush1.msra.mxu0 %v55
    %135 = vmatprep.subr.mxu0 0.0
    %136 = vmatpush2.msra.mxu0 0.0
    %137 = vmatprep.subr.mxu0 0.0
    %138 = vmatpush2.msra.mxu0 0.0
    %139 = vmatprep.subr.mxu0 0.0
    %140 = vmatpush2.msra.mxu0 0.0
    %141 = vmatprep.subr.mxu0 0.0
    %142 = vmatpush2.msra.mxu0 0.0
    %143 = vmatprep.subr.mxu0 0.0
    %144 = vmatpush2.msra.mxu0 0.0
    %145 = vmatprep.subr.mxu0 0.0
    %146 = vmatpush2.msra.mxu0 0.0
    %147 = vmatprep.subr.mxu0 0.0
    %148 = vmatpush2.msra.mxu0 0.0
    %149 = vmatprep.subr.mxu0 0.0
    %150 = vmatpush2.msra.mxu0 0.0
    %151 = vmatprep.subr.mxu0 0.0
    %152 = vmatpush2.msra.mxu0 0.0
    %153 = vmatprep.subr.mxu0 0.0
    %154 = vmatpush2.msra.mxu0 0.0
    %155 = vmatprep.subr.mxu0 0.0
    %156 = vmatpush2.msra.mxu0 0.0
    %157 = vmatprep.subr.mxu0 0.0
    %158 = vmatpush2.msra.mxu0 0.0
    %159 = vmatprep.subr.mxu0 0.0
    %160 = vmatpush2.msra.mxu0 0.0
    %161 = vmatprep.subr.mxu0 0.0
    %162 = vmatpush2.msra.mxu0 0.0
    %163 = vmatprep.subr.mxu0 0.0
    %164 = vmatpush2.msra.mxu0 0.0
    %165 = vmatprep.subr.mxu0 0.0
    %166 = vmatpush2.msra.mxu0 0.0
    %167 = vmatprep.mubr.f32.mxu0 0.0
    %168 = vmatmul.mubr.f32.gmra.mxu0 %v54
    %v169 = vpop.f32.mrf.mxu0
    %v170 = vadd.f32 0.0, %v169
    %v171 = vpop.f32.mrf.mxu0
    %v172 = vadd.f32 0.0, %v171
    %173 = vdwg.mxu0
    %v174 = vxor.u32 %v170, 2147483648
    %v175 = vxor.u32 %v172, 2147483648
    %v176 = vmul.f32 %v174, 1.442695
    %v177 = vpow.pop %v176
    %v178 = vmul.f32 %v175, 1.442695
    %v179 = vpow.pop %v178
    %v180 = vadd.f32 %v177, 1.0
    %v181 = vadd.f32 %v179, 1.0
    %v182 = vrcp.pop %v180
    %v183 = vmul.f32 1.0, %v182
    %v184 = vrcp.pop %v181
    %v185 = vmul.f32 1.0, %v184
    %v186 = vmul.f32 %v183, %v54
    %187 = vmatprep.subr.mxu0 0.0
    %188 = vmatpush1.msra.mxu0 %v102
    %189 = vmatprep.subr.mxu0 0.0
    %190 = vmatpush1.msra.mxu0 %v101
    %191 = vmatprep.subr.mxu0 0.0
    %192 = vmatpush1.msra.mxu0 %v100
    %193 = vmatprep.subr.mxu0 0.0
    %194 = vmatpush1.msra.mxu0 %v99
    %195 = vmatprep.subr.mxu0 0.0
    %196 = vmatpush1.msra.mxu0 %v98
    %197 = vmatprep.subr.mxu0 0.0
    %198 = vmatpush1.msra.mxu0 %v97
    %199 = vmatprep.subr.mxu0 0.0
    %200 = vmatpush1.msra.mxu0 %v96
    %201 = vmatprep.subr.mxu0 0.0
    %202 = vmatpush1.msra.mxu0 %v95
    %203 = vmatprep.subr.mxu0 0.0
    %204 = vmatpush1.msra.mxu0 %v94
    %205 = vmatprep.subr.mxu0 0.0
    %206 = vmatpush1.msra.mxu0 %v93
    %207 = vmatprep.subr.mxu0 0.0
    %208 = vmatpush1.msra.mxu0 %v92
    %209 = vmatprep.subr.mxu0 0.0
    %210 = vmatpush1.msra.mxu0 %v91
    %211 = vmatprep.subr.mxu0 0.0
    %212 = vmatpush1.msra.mxu0 %v90
    %213 = vmatprep.subr.mxu0 0.0
    %214 = vmatpush1.msra.mxu0 %v89
    %215 = vmatprep.subr.mxu0 0.0
    %216 = vmatpush1.msra.mxu0 %v88
    %217 = vmatprep.subr.mxu0 0.0
    %218 = vmatpush1.msra.mxu0 %v87
    %219 = vmatprep.subr.mxu0 0.0
    %220 = vmatpush2.msra.mxu0 0.0
    %221 = vmatprep.subr.mxu0 0.0
    %222 = vmatpush2.msra.mxu0 0.0
    %223 = vmatprep.subr.mxu0 0.0
    %224 = vmatpush2.msra.mxu0 0.0
    %225 = vmatprep.subr.mxu0 0.0
    %226 = vmatpush2.msra.mxu0 0.0
    %227 = vmatprep.subr.mxu0 0.0
    %228 = vmatpush2.msra.mxu0 0.0
    %229 = vmatprep.subr.mxu0 0.0
    %230 = vmatpush2.msra.mxu0 0.0
    %231 = vmatprep.subr.mxu0 0.0
    %232 = vmatpush2.msra.mxu0 0.0
    %233 = vmatprep.subr.mxu0 0.0
    %234 = vmatpush2.msra.mxu0 0.0
    %235 = vmatprep.subr.mxu0 0.0
    %236 = vmatpush2.msra.mxu0 0.0
    %237 = vmatprep.subr.mxu0 0.0
    %238 = vmatpush2.msra.mxu0 0.0
    %239 = vmatprep.subr.mxu0 0.0
    %240 = vmatpush2.msra.mxu0 0.0
    %241 = vmatprep.subr.mxu0 0.0
    %242 = vmatpush2.msra.mxu0 0.0
    %243 = vmatprep.subr.mxu0 0.0
    %244 = vmatpush2.msra.mxu0 0.0
    %245 = vmatprep.subr.mxu0 0.0
    %246 = vmatpush2.msra.mxu0 0.0
    %247 = vmatprep.subr.mxu0 0.0
    %248 = vmatpush2.msra.mxu0 0.0
    %249 = vmatprep.subr.mxu0 0.0
    %250 = vmatpush2.msra.mxu0 0.0
    %251 = vmatprep.mubr.f32.mxu0 0.0
    %252 = vmatmul.mubr.f32.gmra.mxu0 %v186
    %v253 = vpop.f32.mrf.mxu0
    %v254 = vadd.f32 0.0, %v253
    %v255 = vpop.f32.mrf.mxu0
    %256 = vdwg.mxu0
    %v257 = vtanh.pop %v254
    %v258 = vsub.f32 1.0, %v185
    %v259 = vsub.f32 %v257, %v54
    %v260 = vmul.f32 %v258, %v259
    %261 = vst [vmem:[#allocation8] sm:$0xff] %v260
    // Predicated region
    $region26: #{tpu_custom_call.1} parent=1 // pred_check
      _
    $region27: #{tpu_custom_call.1} parent=1 // pred_check_branch
      %263 = sbr.rel (0) target = $region29
    $region28: #{tpu_custom_call.1} parent=1 // pred_region
      %s265 = ssub.s32 128, 128
      %266 = vsyncadd [#allocation4], %s265
      %s268 = sshll.u32 [#allocation8], 4
      %s269 = int_to_ptr.vmem [resolvable:$true] %s268
      %271 = dma.vmem_to_hbm [thread:$0]  %s269, 128, %s3, [#allocation4]
    $region29: #{tpu_custom_call.1} parent=1 // pred_fallthru
      _
    // Predicated region
    $region30: #{tpu_custom_call.1} parent=1 // pred_check
      _
    $region31: #{tpu_custom_call.1} parent=1 // pred_check_branch
      %273 = sbr.rel (0) target = $region33
    $region32: #{tpu_custom_call.1} parent=1 // pred_region
      %274 = dma.done [#allocation4], 128
    $region33: #{tpu_custom_call.1} parent=1 // pred_fallthru
      _
    %275 = vsyncpa [#allocation3], 1
    %276 = vsyncpa [#allocation6], 1
    %277 = vsyncpa [#allocation4], 1

</llo_original>
